<compile_context>
chip_gen: v5e
topology: v5e:2x2
jax: 0.10.0
libtpu: 0.0.40
codegen_flags: <defaults>
</compile_context>

<pallas_src>
import functools

import numpy as np
import jax
import jax.numpy as jnp
from jax.experimental import pallas as pl
from jax.experimental.pallas import tpu as pltpu

EPS = 1e-5
VMEM_LIMIT = 32 * 1024 * 1024   # explicit scoped-VMEM cap (safe on v5e/v6e/v7x)


def _rup(x, m):
    return (x + m - 1) // m * m


# ---------------------------------------------------------------------------
# Tile selection (deterministic from static shapes)
# ---------------------------------------------------------------------------
def _choose_tm(M):
    if M <= 256:
        tm = _rup(M, 16)          # bf16-friendly sublane multiple, no 128-pad
    else:
        tm = 256
    return tm, _rup(M, tm)


def _choose_tk(K):
    Kr = _rup(K, 128)
    if Kr <= 1024:
        return Kr, Kr             # single K step
    for tk in (1024, 768, 512, 384, 256):
        if Kr % tk == 0:
            return tk, Kr
    return 512, _rup(Kr, 512)


def _choose_tn(N):
    Nr = _rup(N, 128)
    if Nr >= 512:
        tn = 256                  # MXU-friendly, still >=2 N tiles
    elif Nr >= 256:
        tn = 128                  # keep 2 tiles on the parallel j axis
    else:
        tn = Nr
    return tn, _rup(Nr, tn)


# ---------------------------------------------------------------------------
# Pallas kernels
# ---------------------------------------------------------------------------
def _mm_kernel(a_ref, w_ref, scale_ref, shift_ref, o_ref, acc_ref, *, act):
    @pl.when(pl.program_id(2) == 0)
    def _():
        acc_ref[...] = jnp.zeros_like(acc_ref)

    acc_ref[...] += jnp.dot(a_ref[...], w_ref[...],
                            preferred_element_type=jnp.float32)

    @pl.when(pl.program_id(2) == pl.num_programs(2) - 1)
    def _():
        y = acc_ref[...] * scale_ref[...] + shift_ref[...]
        if act == "relu":
            y = jnp.maximum(y, 0.0)
        elif act == "sigmoid":
            y = jax.nn.sigmoid(y)
        o_ref[...] = y.astype(o_ref.dtype)


def _mm_dual_kernel(a_ref, w_ref, scale_ref, shift_ref, o_ref, s_ref, acc_ref):
    """Same matmul, but emits raw logits AND sigmoid(logits) in one epilogue."""
    @pl.when(pl.program_id(2) == 0)
    def _():
        acc_ref[...] = jnp.zeros_like(acc_ref)

    acc_ref[...] += jnp.dot(a_ref[...], w_ref[...],
                            preferred_element_type=jnp.float32)

    @pl.when(pl.program_id(2) == pl.num_programs(2) - 1)
    def _():
        y = acc_ref[...] * scale_ref[...] + shift_ref[...]
        o_ref[...] = y.astype(o_ref.dtype)
        s_ref[...] = jax.nn.sigmoid(y).astype(s_ref.dtype)


def _bmul_kernel(x_ref, m_ref, o_ref):
    o_ref[...] = x_ref[...] * m_ref[...]       # in-kernel broadcast


def _contrast_kernel(l1_ref, c1_ref, c2_ref, c3_ref, o_ref):
    Cp = l1_ref.shape[1]
    l1 = l1_ref[...]
    c1 = c1_ref[...]
    c2 = c2_ref[...]
    c3 = c3_ref[...]
    o_ref[:, 0 * Cp:1 * Cp, :] = l1 - c1
    o_ref[:, 1 * Cp:2 * Cp, :] = l1 - c2
    o_ref[:, 2 * Cp:3 * Cp, :] = l1 - c3
    o_ref[:, 3 * Cp:4 * Cp, :] = c1 - c2
    o_ref[:, 4 * Cp:5 * Cp, :] = c1 - c3
    o_ref[:, 5 * Cp:6 * Cp, :] = c2 - c3


# ---------------------------------------------------------------------------
# Cached pallas_call builders (reuse traced callables across the forward pass)
# ---------------------------------------------------------------------------
@functools.lru_cache(maxsize=None)
def _build_matmul_call(Mp, Kp, Np, tm, tn, tk, act, dual):
    grid = (Mp // tm, Np // tn, Kp // tk)
    in_specs = [
        pl.BlockSpec((tm, tk), lambda i, j, k: (i, k)),
        pl.BlockSpec((tk, tn), lambda i, j, k: (k, j)),
        pl.BlockSpec((1, tn), lambda i, j, k: (0, j)),
        pl.BlockSpec((1, tn), lambda i, j, k: (0, j)),
    ]
    if dual:
        kernel = _mm_dual_kernel
        out_shape = (jax.ShapeDtypeStruct((Mp, Np), jnp.float32),
                     jax.ShapeDtypeStruct((Mp, Np), jnp.float32))
        out_specs = (pl.BlockSpec((tm, tn), lambda i, j, k: (i, j)),
                     pl.BlockSpec((tm, tn), lambda i, j, k: (i, j)))
        n_out = 2
    else:
        kernel = functools.partial(_mm_kernel, act=act)
        out_shape = jax.ShapeDtypeStruct((Mp, Np), jnp.float32)
        out_specs = pl.BlockSpec((tm, tn), lambda i, j, k: (i, j))
        n_out = 1
    ce = pl.CostEstimate(
        flops=2 * Mp * Kp * Np,
        transcendentals=Mp * Np if (dual or act == "sigmoid") else 0,
        bytes_accessed=(Mp * Kp + Kp * Np) * 2 + n_out * Mp * Np * 4)
    return pl.pallas_call(
        kernel,
        out_shape=out_shape,
        grid_spec=pltpu.PrefetchScalarGridSpec(
            num_scalar_prefetch=0,
            grid=grid,
            in_specs=in_specs,
            out_specs=out_specs,
            scratch_shapes=[pltpu.VMEM((tm, tn), jnp.float32)],
        ),
        compiler_params=pltpu.CompilerParams(
            dimension_semantics=("parallel", "parallel", "arbitrary"),
            vmem_limit_bytes=VMEM_LIMIT),
        cost_estimate=ce,
    )


@functools.lru_cache(maxsize=None)
def _build_bmul_call(B, C, HW, mC, mHW, tc):
    if mC == 1:          # spatial map, broadcast over channels
        m_spec = pl.BlockSpec((1, 1, mHW), lambda b, ci: (b, 0, 0))
    else:                # per-channel attention, broadcast over spatial
        m_spec = pl.BlockSpec((1, tc, 1), lambda b, ci: (b, ci, 0))
    return pl.pallas_call(
        _bmul_kernel,
        out_shape=jax.ShapeDtypeStruct((B, C, HW), jnp.float32),
        grid_spec=pltpu.PrefetchScalarGridSpec(
            num_scalar_prefetch=0,
            grid=(B, C // tc),
            in_specs=[pl.BlockSpec((1, tc, HW), lambda b, ci: (b, ci, 0)),
                      m_spec],
            out_specs=pl.BlockSpec((1, tc, HW), lambda b, ci: (b, ci, 0)),
        ),
        compiler_params=pltpu.CompilerParams(
            dimension_semantics=("parallel", "parallel"),
            vmem_limit_bytes=VMEM_LIMIT),
    )


@functools.lru_cache(maxsize=None)
def _build_contrast_call(B, Cp, HW):
    spec_in = pl.BlockSpec((1, Cp, HW), lambda b: (b, 0, 0))
    return pl.pallas_call(
        _contrast_kernel,
        out_shape=jax.ShapeDtypeStruct((B, 6 * Cp, HW), jnp.float32),
        grid_spec=pltpu.PrefetchScalarGridSpec(
            num_scalar_prefetch=0,
            grid=(B,),
            in_specs=[spec_in, spec_in, spec_in, spec_in],
            out_specs=pl.BlockSpec((1, 6 * Cp, HW), lambda b: (b, 0, 0)),
        ),
        compiler_params=pltpu.CompilerParams(
            dimension_semantics=("parallel",),
            vmem_limit_bytes=VMEM_LIMIT),
    )


# ---------------------------------------------------------------------------
# Wrappers
# ---------------------------------------------------------------------------
def prep_matmul_w(wmat):
    """Pre-pad + bf16-cast a (K, N) weight matrix once, at init time."""
    wmat = jnp.asarray(wmat, jnp.float32)
    K, N = wmat.shape
    _, Kp = _choose_tk(K)
    _, Np = _choose_tn(N)
    w_p = jnp.pad(wmat, ((0, Kp - K), (0, Np - N))).astype(jnp.bfloat16)
    return {"w": w_p, "K": K, "N": N}


def matmul_fused(a, wp, scale, shift, act="none", dual_sigmoid=False):
    """(M,K)@(K,N) on the MXU (bf16 operands, f32 acc) with fused affine+act."""
    M, K = a.shape
    assert K == wp["K"], (K, wp["K"])
    N = wp["N"]
    w_p = wp["w"]
    Kp, Np = w_p.shape
    tk, _ = _choose_tk(K)
    tn, _ = _choose_tn(N)
    tm, Mp = _choose_tm(M)

    a_p = a.astype(jnp.bfloat16)
    if (Mp, Kp) != (M, K):
        a_p = jnp.pad(a_p, ((0, Mp - M), (0, Kp - K)))
    sc = jnp.pad(scale.reshape(1, -1).astype(jnp.float32),
                 ((0, 0), (0, Np - N)))
    sh = jnp.pad(shift.reshape(1, -1).astype(jnp.float32),
                 ((0, 0), (0, Np - N)))

    call = _build_matmul_call(Mp, Kp, Np, tm, tn, tk, act, dual_sigmoid)
    out = call(a_p, w_p, sc, sh)
    if dual_sigmoid:
        return out[0][:M, :N], out[1][:M, :N]
    return out[:M, :N]


def bcast_mul(x, m):
    """x:(B,C,H,W) * m, where m is (B,1,H,W) or (B,C,1,1), broadcast in-kernel."""
    B, C, H, W = x.shape
    HW = H * W
    mB, mC, mH, mW = m.shape
    assert mB == B and (mC == 1 or (mC == C and mH == 1 and mW == 1))
    mHW = mH * mW
    tc = 64 if C % 64 == 0 else (8 if C % 8 == 0 else C)
    call = _build_bmul_call(B, C, HW, mC, mHW, tc)
    out = call(x.reshape(B, C, HW), m.reshape(B, mC, mHW))
    return out.reshape(B, C, H, W)


def fused_contrast_diffs(l1, c1, c2, c3):
    """All six pairwise differences + channel concat in one pallas_call."""
    B, Cp, H, W = l1.shape
    HW = H * W
    call = _build_contrast_call(B, Cp, HW)
    out = call(l1.reshape(B, Cp, HW), c1.reshape(B, Cp, HW),
               c2.reshape(B, Cp, HW), c3.reshape(B, Cp, HW))
    return out.reshape(B, 6 * Cp, H, W)


# ---------------------------------------------------------------------------
# Conv / pooling / resize helpers (im2col glue + Pallas matmul)
# ---------------------------------------------------------------------------
def _im2col(x, kh, kw, stride, padding, dilation):
    B, C, H, W = x.shape
    OH = (H + 2 * padding - dilation * (kh - 1) - 1) // stride + 1
    OW = (W + 2 * padding - dilation * (kw - 1) - 1) // stride + 1
    xp = jnp.pad(x.astype(jnp.bfloat16),     # bf16 patches: half the HBM traffic
                 ((0, 0), (0, 0), (padding, padding), (padding, padding)))
    cols = []
    for i in range(kh):
        for j in range(kw):
            hs, ws = i * dilation, j * dilation
            patch = jax.lax.slice(
                xp, (0, 0, hs, ws),
                (B, C, hs + (OH - 1) * stride + 1, ws + (OW - 1) * stride + 1),
                (1, 1, stride, stride))            # (B, C, OH, OW)
            cols.append(patch)
    col = jnp.stack(cols, axis=2)                  # (B, C, kh*kw, OH, OW)
    col = col.transpose(0, 3, 4, 1, 2).reshape(B * OH * OW, C * kh * kw)
    return col, OH, OW


def conv2d(x, p, scale, shift, act="none", stride=1, padding=0, dilation=1,
           dual_sigmoid=False):
    B = x.shape[0]
    col, OH, OW = _im2col(x, p["kh"], p["kw"], stride, padding, dilation)
    res = matmul_fused(col, p["wm"], scale, shift, act,
                       dual_sigmoid=dual_sigmoid)
    cout = p["cout"]

    def to_img(o):
        return o.reshape(B, OH, OW, cout).transpose(0, 3, 1, 2)

    if dual_sigmoid:
        return to_img(res[0]), to_img(res[1])
    return to_img(res)


def conv_bn_relu(x, p, stride=1, padding=1, dilation=1):
    # TODO(synk): BN eval-mode with synthetic running stats (mean=0, var=1).
    bn_scale = p["gamma"] * np.float32(1.0 / np.sqrt(1.0 + EPS))
    bias = p["b"] if p["b"] is not None else jnp.zeros_like(p["gamma"])
    shift = p["beta"] + bias * bn_scale
    return conv2d(x, p, bn_scale, shift, "relu", stride, padding, dilation)


def conv_plain(x, p, stride=1, padding=1, dilation=1, act="none",
               dual_sigmoid=False):
    cout = p["cout"]
    scale = jnp.ones((cout,), jnp.float32)
    shift = p["b"] if p["b"] is not None else jnp.zeros((cout,), jnp.float32)
    return conv2d(x, p, scale, shift, act, stride, padding, dilation,
                  dual_sigmoid=dual_sigmoid)


def maxpool2(x):
    # TODO(synk): assumes even H/W (ceil_mode moot for the shapes used here).
    B, C, H, W = x.shape
    return x.reshape(B, C, H // 2, 2, W // 2, 2).max(axis=(3, 5))


def upsample2_bilinear(x):  # scale_factor=2, align_corners=False
    B, C, H, W = x.shape
    return jax.image.resize(x, (B, C, 2 * H, 2 * W), method="bilinear")


def upsample_bilinear_ac(x, out_h, out_w):  # align_corners=True
    B, C, H, W = x.shape
    sy = (H - 1) / (out_h - 1) if out_h > 1 else 0.0
    sx = (W - 1) / (out_w - 1) if out_w > 1 else 0.0
    yy = jnp.arange(out_h, dtype=jnp.float32) * sy
    xx = jnp.arange(out_w, dtype=jnp.float32) * sx
    y0 = jnp.floor(yy).astype(jnp.int32)
    x0 = jnp.floor(xx).astype(jnp.int32)
    y1 = jnp.minimum(y0 + 1, H - 1)
    x1 = jnp.minimum(x0 + 1, W - 1)
    fy = (yy - y0.astype(jnp.float32))[None, None, :, None]
    fx = (xx - x0.astype(jnp.float32))[None, None, None, :]
    r0 = x[:, :, y0, :]
    r1 = x[:, :, y1, :]
    rows = r0 * (1.0 - fy) + r1 * fy
    c0 = rows[:, :, :, x0]
    c1 = rows[:, :, :, x1]
    return c0 * (1.0 - fx) + c1 * fx


# ---------------------------------------------------------------------------
# Parameter init (deterministic, synthetic) — weights prepared for the MXU
# ---------------------------------------------------------------------------
class KeyGen:
    def __init__(self, seed):
        self._key = jax.random.PRNGKey(seed)
        self._i = 0

    def __call__(self):
        self._i += 1
        return jax.random.fold_in(self._key, self._i)


def init_conv(kg, cout, cin, kh, kw, bias=True, bn=False):
    fan_in = cin * kh * kw
    w = (jax.random.normal(kg(), (cout, cin, kh, kw), jnp.float32)
         * np.float32(1.0 / np.sqrt(fan_in)))
    p = {"kh": kh, "kw": kw, "cout": cout,
         "wm": prep_matmul_w(w.reshape(cout, cin * kh * kw).T)}
    p["b"] = (jax.random.normal(kg(), (cout,), jnp.float32) * 0.01) if bias else None
    if bn:
        p["gamma"] = jnp.ones((cout,), jnp.float32)
        p["beta"] = jnp.zeros((cout,), jnp.float32)
    return p


def init_se(kg, channel, reduction=4, num_context=6):
    c2 = channel // 2
    mid = channel // reduction
    ig = channel // num_context          # in-channels per group (conv1)
    og = mid // num_context              # out-channels per group (conv1)
    w_ctx1 = jax.random.normal(kg(), (c2, channel), jnp.float32) / np.sqrt(channel)
    w_ctx2 = jax.random.normal(kg(), (num_context, c2), jnp.float32) / np.sqrt(c2)
    w_ch1 = np.asarray(jax.random.normal(kg(), (mid, ig), jnp.float32) / np.sqrt(ig))
    w_ch2 = np.asarray(jax.random.normal(kg(), (channel, og), jnp.float32) / np.sqrt(og))
    # grouped 1x1 convs -> block-diagonal matmul matrices
    bd1 = np.zeros((channel, mid), np.float32)
    bd2 = np.zeros((mid, channel), np.float32)
    for g in range(num_context):
        bd1[g * ig:(g + 1) * ig, g * og:(g + 1) * og] = w_ch1[g * og:(g + 1) * og, :].T
        bd2[g * og:(g + 1) * og, g * ig:(g + 1) * ig] = w_ch2[g * ig:(g + 1) * ig, :].T
    return {"ctx1": prep_matmul_w(np.asarray(w_ctx1).T),
            "ctx2": prep_matmul_w(np.asarray(w_ctx2).T),
            "ch1": prep_matmul_w(bd1), "ch2": prep_matmul_w(bd2),
            "channel": channel, "num_context": num_context}


def init_contrast(kg, planes):
    outp = planes // 8
    return {
        "local_1": init_conv(kg, outp, planes, 3, 3, True, True),
        "context_1": init_conv(kg, outp, planes, 3, 3, True, True),
        "context_2": init_conv(kg, outp, planes, 3, 3, True, True),
        "context_3": init_conv(kg, outp, planes, 3, 3, True, True),
        "se": init_se(kg, outp * 6),
    }


def init_refnet(kg, in_ch, inc_ch):
    p = {"conv0": init_conv(kg, inc_ch, in_ch, 3, 3, True, False),
         "conv1": init_conv(kg, 64, inc_ch, 3, 3, True, True)}
    for i in range(2, 6):
        p[f"conv{i}"] = init_conv(kg, 64, 64, 3, 3, True, True)
    for i in range(1, 5):
        p[f"deconv{i}"] = init_conv(kg, 64, 128, 3, 3, True, True)
    p["deconv0"] = init_conv(kg, 4, 64, 3, 3, True, False)
    return p


def init_glassnet(seed=0):
    kg = KeyGen(seed)
    # TODO(synk): ResNeXt101 backbone approximated (class not given in source).
    P = {"backbone": {
        "layer0": init_conv(kg, 64, 3, 7, 7, False, True),
        "layer1": init_conv(kg, 256, 64, 3, 3, False, True),
        "layer2": init_conv(kg, 512, 256, 3, 3, False, True),
        "layer3": init_conv(kg, 1024, 512, 3, 3, False, True),
        "layer4": init_conv(kg, 2048, 1024, 3, 3, False, True),
    }}
    P["contrast_4"] = init_contrast(kg, 2048)
    P["contrast_3"] = init_contrast(kg, 1024)
    P["contrast_2"] = init_contrast(kg, 512)
    P["contrast_1"] = init_contrast(kg, 256)
    P["up_4"] = init_conv(kg, 768, 1536, 3, 3, True, True)
    P["up_3"] = init_conv(kg, 384, 768, 3, 3, True, True)
    P["up_2"] = init_conv(kg, 192, 384, 3, 3, True, True)
    P["up_1"] = init_conv(kg, 96, 192, 3, 3, True, True)
    P["up_0"] = init_conv(kg, 64, 64, 3, 3, True, True)
    P["layer4_predict"] = init_conv(kg, 1, 768, 3, 3, True, False)
    P["layer3_predict"] = init_conv(kg, 1, 384, 3, 3, True, False)
    P["layer2_predict"] = init_conv(kg, 1, 192, 3, 3, True, False)
    P["layer1_predict"] = init_conv(kg, 1, 96, 3, 3, True, False)
    P["refine"] = init_refnet(kg, 68, 64)
    return P


# ---------------------------------------------------------------------------
# Modules
# ---------------------------------------------------------------------------
def se_layer(x, p):
    B, C, H, W = x.shape
    ng = p["num_context"]
    cc = p["channel"] // ng
    y = jnp.mean(x, axis=(2, 3))                       # AdaptiveAvgPool2d(1)
    c2 = p["ctx1"]["N"]
    mid = p["ch1"]["N"]
    h = matmul_fused(y, p["ctx1"], jnp.ones((c2,)), jnp.zeros((c2,)), "relu")
    ctx = matmul_fused(h, p["ctx2"], jnp.ones((ng,)), jnp.zeros((ng,)), "sigmoid")
    h2 = matmul_fused(y, p["ch1"], jnp.ones((mid,)), jnp.zeros((mid,)), "relu")
    ch = matmul_fused(h2, p["ch2"], jnp.ones((C,)), jnp.zeros((C,)), "sigmoid")
    ctx_rep = jnp.repeat(ctx, cc, axis=1)              # repeat(1,1,cc,1).view(-1,C,1,1)
    att = (ctx_rep * ch).reshape(B, C, 1, 1)
    return bcast_mul(x, att)                           # broadcast inside kernel


def dense_contrast(x, p):
    l1 = conv_bn_relu(x, p["local_1"], padding=1, dilation=1)
    c1 = conv_bn_relu(x, p["context_1"], padding=2, dilation=2)
    c2 = conv_bn_relu(x, p["context_2"], padding=4, dilation=4)
    c3 = conv_bn_relu(x, p["context_3"], padding=8, dilation=8)
    out = fused_contrast_diffs(l1, c1, c2, c3)         # 6 diffs + concat, fused
    return se_layer(out, p["se"])


def refnet(x, p):
    hx = conv_plain(x, p["conv0"], padding=1)
    hx1 = conv_bn_relu(hx, p["conv1"])
    hx = maxpool2(hx1)
    hx2 = conv_bn_relu(hx, p["conv2"])
    hx = maxpool2(hx2)
    hx3 = conv_bn_relu(hx, p["conv3"])
    hx = maxpool2(hx3)
    hx4 = conv_bn_relu(hx, p["conv4"])
    hx = maxpool2(hx4)
    hx5 = conv_bn_relu(hx, p["conv5"])
    hx = upsample2_bilinear(hx5)
    d4 = conv_bn_relu(jnp.concatenate([hx, hx4], axis=1), p["deconv4"])
    hx = upsample2_bilinear(d4)
    d3 = conv_bn_relu(jnp.concatenate([hx, hx3], axis=1), p["deconv3"])
    hx = upsample2_bilinear(d3)
    d2 = conv_bn_relu(jnp.concatenate([hx, hx2], axis=1), p["deconv2"])
    hx = upsample2_bilinear(d2)
    d1 = conv_bn_relu(jnp.concatenate([hx, hx1], axis=1), p["deconv1"])
    output = conv_plain(d1, p["deconv0"], padding=1)
    return output[:, :1], output[:, 1:]                # torch.split([1,3],1)


def glassnet_forward(x, P):
    _, _, H, W = x.shape
    bb = P["backbone"]
    layer0 = conv_bn_relu(x, bb["layer0"], stride=2, padding=3)
    layer1 = conv_bn_relu(layer0, bb["layer1"], stride=2, padding=1)
    layer2 = conv_bn_relu(layer1, bb["layer2"], stride=2, padding=1)
    layer3 = conv_bn_relu(layer2, bb["layer3"], stride=2, padding=1)
    layer4 = conv_bn_relu(layer3, bb["layer4"], stride=2, padding=1)

    contrast_4 = dense_contrast(layer4, P["contrast_4"])
    up4 = conv_bn_relu(upsample2_bilinear(contrast_4), P["up_4"])
    layer4_predict, layer4_map = conv_plain(up4, P["layer4_predict"],
                                            padding=1, dual_sigmoid=True)

    contrast_3 = dense_contrast(bcast_mul(layer3, layer4_map), P["contrast_3"])
    up3 = conv_bn_relu(upsample2_bilinear(contrast_3), P["up_3"])
    layer3_predict, layer3_map = conv_plain(up3, P["layer3_predict"],
                                            padding=1, dual_sigmoid=True)

    contrast_2 = dense_contrast(bcast_mul(layer2, layer3_map), P["contrast_2"])
    up2 = conv_bn_relu(upsample2_bilinear(contrast_2), P["up_2"])
    layer2_predict, layer2_map = conv_plain(up2, P["layer2_predict"],
                                            padding=1, dual_sigmoid=True)

    contrast_1 = dense_contrast(bcast_mul(layer1, layer2_map), P["contrast_1"])
    up1 = conv_bn_relu(upsample2_bilinear(contrast_1), P["up_1"])
    layer1_predict, layer1_map = conv_plain(up1, P["layer1_predict"],
                                            padding=1, dual_sigmoid=True)
    layer1_map_full = upsample_bilinear_ac(layer1_map, H, W)

    up0 = conv_bn_relu(upsample2_bilinear(layer0), P["up_0"])
    layer0_predict, ref = refnet(
        jnp.concatenate([x, up0, layer1_map_full], axis=1), P["refine"])

    layer4_predict = upsample_bilinear_ac(layer4_predict, H, W)
    layer3_predict = upsample_bilinear_ac(layer3_predict, H, W)
    layer2_predict = upsample_bilinear_ac(layer2_predict, H, W)
    layer1_predict = upsample_bilinear_ac(layer1_predict, H, W)
    return (layer0_predict, layer1_predict, layer2_predict,
            layer3_predict, layer4_predict, ref)


if __name__ == "__main__":
    key = jax.random.PRNGKey(0)
    x = jax.random.normal(key, (1, 3, 32, 32), jnp.float32)
    params = init_glassnet(seed=0)
    outs = glassnet_forward(x, params)
    outs = jax.block_until_ready(outs)
    assert outs[0].shape == (1, 1, 32, 32)
    assert all(o.shape == (1, 1, 32, 32) for o in outs[1:5])
    assert outs[5].shape == (1, 3, 32, 32)
    print("KERNEL_OK")
</pallas_src>

<mosaic_0001>
module attributes {stable_mosaic.version = 11 : i64} {
  func.func @_mm_kernel(%arg0: i32, %arg1: i32, %arg2: i32, %arg3: memref<256x256xbf16, #tpu.memory_space<vmem>>, %arg4: memref<256x128xbf16, #tpu.memory_space<vmem>>, %arg5: memref<1x128xf32, #tpu.memory_space<vmem>>, %arg6: memref<1x128xf32, #tpu.memory_space<vmem>>, %arg7: memref<256x128xf32, #tpu.memory_space<vmem>>, %arg8: memref<256x128xf32, #tpu.memory_space<vmem>>) attributes {dimension_semantics = [#tpu.dimension_semantics<parallel>, #tpu.dimension_semantics<parallel>, #tpu.dimension_semantics<arbitrary>], iteration_bounds = array<i64: 1, 1, 1>, scalar_prefetch = 0 : i64, scratch_operands = 1 : i64, tpu.core_type = #tpu.core_type<tc>, window_params = [{transform_indices = @transform_0, window_bounds = array<i64: 256, 256>}, {transform_indices = @transform_1, window_bounds = array<i64: 256, 128>}, {transform_indices = @transform_2, window_bounds = array<i64: 1, 128>}, {transform_indices = @transform_3, window_bounds = array<i64: 1, 128>}, {transform_indices = @transform_4, window_bounds = array<i64: 256, 128>}]} {
    %c0_i32 = arith.constant 0 : i32
    %0 = arith.cmpi eq, %arg2, %c0_i32 : i32
    %1 = arith.extui %0 : i1 to i32
    %c0_i32_0 = arith.constant 0 : i32
    %2 = arith.cmpi ne, %1, %c0_i32_0 : i32
    scf.if %2 {
      %cst_10 = arith.constant 0.000000e+00 : f32
      %12 = vector.broadcast %cst_10 : f32 to vector<256x128xf32>
      %c0_11 = arith.constant 0 : index
      %c0_12 = arith.constant 0 : index
      %13 = vector.load %arg8[%c0_11, %c0_12] : memref<256x128xf32, #tpu.memory_space<vmem>>, vector<256x128xf32>
      tpu.vector_store %arg8[%c0_11, %c0_12], %12 {strides = array<i32>} : memref<256x128xf32, #tpu.memory_space<vmem>>, vector<256x128xf32>,
    } else {
    }
    %c0 = arith.constant 0 : index
    %c0_1 = arith.constant 0 : index
    %3 = vector.load %arg8[%c0, %c0_1] : memref<256x128xf32, #tpu.memory_space<vmem>>, vector<256x128xf32>
    %c0_2 = arith.constant 0 : index
    %c0_3 = arith.constant 0 : index
    %4 = vector.load %arg3[%c0_2, %c0_3] : memref<256x256xbf16, #tpu.memory_space<vmem>>, vector<256x256xbf16>
    %c0_4 = arith.constant 0 : index
    %c0_5 = arith.constant 0 : index
    %5 = vector.load %arg4[%c0_4, %c0_5] : memref<256x128xbf16, #tpu.memory_space<vmem>>, vector<256x128xbf16>
    %cst = arith.constant dense<0.000000e+00> : vector<256x128xf32>
    %6 = tpu.matmul %4, %5, %cst {dimension_numbers = #tpu.dot_dimension_numbers<[1], [0], [0], [1], [0, 0, 1, 1], [], []>} : vector<256x256xbf16>, vector<256x128xbf16>, vector<256x128xf32> -> vector<256x128xf32>
    %7 = arith.addf %3, %6 : vector<256x128xf32>
    %c0_6 = arith.constant 0 : index
    %c0_7 = arith.constant 0 : index
    %8 = vector.load %arg8[%c0_6, %c0_7] : memref<256x128xf32, #tpu.memory_space<vmem>>, vector<256x128xf32>
    tpu.vector_store %arg8[%c0_6, %c0_7], %7 {strides = array<i32>} : memref<256x128xf32, #tpu.memory_space<vmem>>, vector<256x128xf32>,
    %c0_i32_8 = arith.constant 0 : i32
    %9 = arith.cmpi eq, %arg2, %c0_i32_8 : i32
    %10 = arith.extui %9 : i1 to i32
    %c0_i32_9 = arith.constant 0 : i32
    %11 = arith.cmpi ne, %10, %c0_i32_9 : i32
    scf.if %11 {
      %c0_10 = arith.constant 0 : index
      %c0_11 = arith.constant 0 : index
      %12 = vector.load %arg8[%c0_10, %c0_11] : memref<256x128xf32, #tpu.memory_space<vmem>>, vector<256x128xf32>
      %c0_12 = arith.constant 0 : index
      %c0_13 = arith.constant 0 : index
      %13 = vector.load %arg5[%c0_12, %c0_13] : memref<1x128xf32, #tpu.memory_space<vmem>>, vector<1x128xf32>
      %14 = vector.broadcast %13 : vector<1x128xf32> to vector<256x128xf32>
      %15 = arith.mulf %12, %14 : vector<256x128xf32>
      %c0_14 = arith.constant 0 : index
      %c0_15 = arith.constant 0 : index
      %16 = vector.load %arg6[%c0_14, %c0_15] : memref<1x128xf32, #tpu.memory_space<vmem>>, vector<1x128xf32>
      %17 = vector.broadcast %16 : vector<1x128xf32> to vector<256x128xf32>
      %18 = arith.addf %15, %17 : vector<256x128xf32>
      %cst_16 = arith.constant 0.000000e+00 : f32
      %19 = vector.broadcast %cst_16 : f32 to vector<256x128xf32>
      %20 = arith.maximumf %18, %19 : vector<256x128xf32>
      %c0_17 = arith.constant 0 : index
      %c0_18 = arith.constant 0 : index
      %21 = vector.load %arg7[%c0_17, %c0_18] : memref<256x128xf32, #tpu.memory_space<vmem>>, vector<256x128xf32>
      tpu.vector_store %arg7[%c0_17, %c0_18], %20 {strides = array<i32>} : memref<256x128xf32, #tpu.memory_space<vmem>>, vector<256x128xf32>,
    } else {
    }
    return
  }
  func.func @transform_0(%arg0: i32, %arg1: i32, %arg2: i32) -> (i32, i32) {
    %c0_i32 = arith.constant 0 : i32
    return %arg0, %arg2 : i32, i32
  }
  func.func @transform_1(%arg0: i32, %arg1: i32, %arg2: i32) -> (i32, i32) {
    %c0_i32 = arith.constant 0 : i32
    return %arg2, %arg1 : i32, i32
  }
  func.func @transform_2(%arg0: i32, %arg1: i32, %arg2: i32) -> (i32, i32) {
    %c0_i32 = arith.constant 0 : i32
    %c0_i32_0 = arith.constant 0 : i32
    return %c0_i32, %arg1 : i32, i32
  }
  func.func @transform_3(%arg0: i32, %arg1: i32, %arg2: i32) -> (i32, i32) {
    %c0_i32 = arith.constant 0 : i32
    %c0_i32_0 = arith.constant 0 : i32
    return %c0_i32, %arg1 : i32, i32
  }
  func.func @transform_4(%arg0: i32, %arg1: i32, %arg2: i32) -> (i32, i32) {
    %c0_i32 = arith.constant 0 : i32
    return %arg0, %arg1 : i32, i32
  }
}

</mosaic_0001>

<llo_original>
// kernel: tpu_custom_call.1
$region0: #{tpu_custom_call.1}
  #allocation0 [shape = 'u32[]', space=smem, size = 0x4, offset = 0x4, fixed_abs, tag = 'smem constant byte address 0x4 - core index']
  #allocation1 [shape = 'u32[72,128]{1,0:T(1,128)}', space=vmem, size = 0x9000, scoped, tag = 'internal scratch']
  #allocation2 [shape = 'f32[256,128]{1,0:T(8,128)}', space=vmem, size = 0x20000, scoped, tag = 'scratch operand']
  %s0 = inlined_call_operand.hbm [shape: bf16[256,256], index: 0, kind: input, shape index: {}]
  %s1 = inlined_call_operand.hbm [shape: bf16[256,128], index: 1, kind: input, shape index: {}]
  %s2 = inlined_call_operand.vmem [shape: f32[1,128], index: 2, kind: input, shape index: {}]
  %s3 = inlined_call_operand.vmem [shape: f32[1,128], index: 3, kind: input, shape index: {}]
  %s4 = inlined_call_operand.hbm [shape: f32[256,128], index: 4, kind: output, shape index: {}]
  %s5 = sld [smem:[#allocation0]]
  $region42: #{tpu_custom_call.1} parent=0
    _
  %s7 = ssub.s32 1, %s5
  %s8 = scalar_select 0, %s7, %s5
  $region1: #{tpu_custom_call.1} parent=0
    #allocation3 [shape = 'u8[131072]{0}', space=vmem, size = 0x20000, scoped, tag = 'input window, operand 0, single buffered']
    #allocation4 [shape = 's32[1]{0}', space=sflag, size = 0x4, scoped, tag = 'scoped memory for tpu_custom_call.1']
    #allocation5 [shape = 's32[1]{0}', space=sflag, size = 0x4, scoped, tag = 'scoped memory for tpu_custom_call.1']
    #allocation6 [shape = 'u8[65536]{0}', space=vmem, size = 0x10000, scoped, tag = 'input window, operand 1, single buffered']
    #allocation7 [shape = 's32[1]{0}', space=sflag, size = 0x4, scoped, tag = 'scoped memory for tpu_custom_call.1']
    #allocation8 [shape = 'u8[131072]{0}', space=vmem, size = 0x20000, scoped, tag = 'output window, operand 0, single buffered']
    %9 = vsyncpa [#allocation4], 0
    %10 = vsyncpa [#allocation7], 0
    %11 = vsyncpa [#allocation5], 0
    // Predicated region
    $region2: #{tpu_custom_call.1} parent=1 // pred_check
      _
    $region3: #{tpu_custom_call.1} parent=1 // pred_check_branch
      %13 = sbr.rel (0) target = $region5
    $region4: #{tpu_custom_call.1} parent=1 // pred_region
      %15 = vsyncadd [#allocation4], 0
      %s16 = sshll.u32 %s0, 4
      %s17 = int_to_ptr.hbm [resolvable:$true] %s16
      %s18 = sshll.u32 [#allocation3], 4
      %s19 = int_to_ptr.vmem [resolvable:$true] %s18
      %24 = dma.hbm_to_vmem [thread:$0]  %s17, 4096, %s19, [#allocation4], 128, 128, 8
    $region5: #{tpu_custom_call.1} parent=1 // pred_fallthru
      _
    // Predicated region
    $region6: #{tpu_custom_call.1} parent=1 // pred_check
      _
    $region7: #{tpu_custom_call.1} parent=1 // pred_check_branch
      %26 = sbr.rel (0) target = $region9
    $region8: #{tpu_custom_call.1} parent=1 // pred_region
      %28 = vsyncadd [#allocation7], 0
      %s29 = sshll.u32 %s1, 4
      %s30 = int_to_ptr.hbm [resolvable:$true] %s29
      %s31 = sshll.u32 [#allocation6], 4
      %s32 = int_to_ptr.vmem [resolvable:$true] %s31
      %37 = dma.hbm_to_vmem [thread:$0]  %s30, 2048, %s32, [#allocation7], 64, 64, 4
    $region9: #{tpu_custom_call.1} parent=1 // pred_fallthru
      _
    // Predicated region
    $region10: #{tpu_custom_call.1} parent=1 // pred_check
      _
    $region11: #{tpu_custom_call.1} parent=1 // pred_check_branch
      %39 = sbr.rel (0) target = $region13
    $region12: #{tpu_custom_call.1} parent=1 // pred_region
      _
    $region13: #{tpu_custom_call.1} parent=1 // pred_fallthru
      _
    // Predicated region
    $region14: #{tpu_custom_call.1} parent=1 // pred_check
      _
    $region15: #{tpu_custom_call.1} parent=1 // pred_check_branch
      %41 = sbr.rel (0) target = $region17
    $region16: #{tpu_custom_call.1} parent=1 // pred_region
      _
    $region17: #{tpu_custom_call.1} parent=1 // pred_fallthru
      _
    // Predicated region
    $region18: #{tpu_custom_call.1} parent=1 // pred_check
      _
    $region19: #{tpu_custom_call.1} parent=1 // pred_check_branch
      %43 = sbr.rel (0) target = $region21
    $region20: #{tpu_custom_call.1} parent=1 // pred_region
      %45 = dma.done [#allocation4], 4096
    $region21: #{tpu_custom_call.1} parent=1 // pred_fallthru
      _
    // Predicated region
    $region22: #{tpu_custom_call.1} parent=1 // pred_check
      _
    $region23: #{tpu_custom_call.1} parent=1 // pred_check_branch
      %47 = sbr.rel (0) target = $region25
    $region24: #{tpu_custom_call.1} parent=1 // pred_region
      %49 = dma.done [#allocation7], 2048
    $region25: #{tpu_custom_call.1} parent=1 // pred_fallthru
      _
    %p50 = scmp.eq.s32.totalorder 0, 0
    // Predicated region
    $region26: #{tpu_custom_call.1} parent=1 // pred_check
      %p51 = pneg %p50
    $region27: #{tpu_custom_call.1} parent=1 // pred_check_branch
      %53 = sbr.rel (%p51) target = $region29
    $region28: #{tpu_custom_call.1} parent=1 // pred_region
      %54 = vst [vmem:[#allocation2] sm:$0xff] 0.0
      %55 = vst [vmem:[#allocation2 + $0x8] sm:$0xff] 0.0
      %56 = vst [vmem:[#allocation2 + $0x10] sm:$0xff] 0.0
      %57 = vst [vmem:[#allocation2 + $0x18] sm:$0xff] 0.0
      %58 = vst [vmem:[#allocation2 + $0x20] sm:$0xff] 0.0
      %59 = vst [vmem:[#allocation2 + $0x28] sm:$0xff] 0.0
      %60 = vst [vmem:[#allocation2 + $0x30] sm:$0xff] 0.0
      %61 = vst [vmem:[#allocation2 + $0x38] sm:$0xff] 0.0
      %62 = vst [vmem:[#allocation2 + $0x40] sm:$0xff] 0.0
      %63 = vst [vmem:[#allocation2 + $0x48] sm:$0xff] 0.0
      %64 = vst [vmem:[#allocation2 + $0x50] sm:$0xff] 0.0
      %65 = vst [vmem:[#allocation2 + $0x58] sm:$0xff] 0.0
      %66 = vst [vmem:[#allocation2 + $0x60] sm:$0xff] 0.0
      %67 = vst [vmem:[#allocation2 + $0x68] sm:$0xff] 0.0
      %68 = vst [vmem:[#allocation2 + $0x70] sm:$0xff] 0.0
      %69 = vst [vmem:[#allocation2 + $0x78] sm:$0xff] 0.0
      %70 = vst [vmem:[#allocation2 + $0x80] sm:$0xff] 0.0
      %71 = vst [vmem:[#allocation2 + $0x88] sm:$0xff] 0.0
      %72 = vst [vmem:[#allocation2 + $0x90] sm:$0xff] 0.0
      %73 = vst [vmem:[#allocation2 + $0x98] sm:$0xff] 0.0
      %74 = vst [vmem:[#allocation2 + $0xa0] sm:$0xff] 0.0
      %75 = vst [vmem:[#allocation2 + $0xa8] sm:$0xff] 0.0
      %76 = vst [vmem:[#allocation2 + $0xb0] sm:$0xff] 0.0
      %77 = vst [vmem:[#allocation2 + $0xb8] sm:$0xff] 0.0
      %78 = vst [vmem:[#allocation2 + $0xc0] sm:$0xff] 0.0
      %79 = vst [vmem:[#allocation2 + $0xc8] sm:$0xff] 0.0
      %80 = vst [vmem:[#allocation2 + $0xd0] sm:$0xff] 0.0
      %81 = vst [vmem:[#allocation2 + $0xd8] sm:$0xff] 0.0
      %82 = vst [vmem:[#allocation2 + $0xe0] sm:$0xff] 0.0
      %83 = vst [vmem:[#allocation2 + $0xe8] sm:$0xff] 0.0
      %84 = vst [vmem:[#allocation2 + $0xf0] sm:$0xff] 0.0
      %85 = vst [vmem:[#allocation2 + $0xf8] sm:$0xff] 0.0
    $region29: #{tpu_custom_call.1} parent=1 // pred_fallthru
      _
    %v86 = vld [vmem:[#allocation2] sm:$0xff]
    %v87 = vld [vmem:[#allocation2 + $0x8] sm:$0xff]
    %v88 = vld [vmem:[#allocation2 + $0x10] sm:$0xff]
    %v89 = vld [vmem:[#allocation2 + $0x18] sm:$0xff]
    %v90 = vld [vmem:[#allocation2 + $0x20] sm:$0xff]
    %v91 = vld [vmem:[#allocation2 + $0x28] sm:$0xff]
    %v92 = vld [vmem:[#allocation2 + $0x30] sm:$0xff]
    %v93 = vld [vmem:[#allocation2 + $0x38] sm:$0xff]
    %v94 = vld [vmem:[#allocation2 + $0x40] sm:$0xff]
    %v95 = vld [vmem:[#allocation2 + $0x48] sm:$0xff]
    %v96 = vld [vmem:[#allocation2 + $0x50] sm:$0xff]
    %v97 = vld [vmem:[#allocation2 + $0x58] sm:$0xff]
    %v98 = vld [vmem:[#allocation2 + $0x60] sm:$0xff]
    %v99 = vld [vmem:[#allocation2 + $0x68] sm:$0xff]
    %v100 = vld [vmem:[#allocation2 + $0x70] sm:$0xff]
    %v101 = vld [vmem:[#allocation2 + $0x78] sm:$0xff]
    %v102 = vld [vmem:[#allocation2 + $0x80] sm:$0xff]
    %v103 = vld [vmem:[#allocation2 + $0x88] sm:$0xff]
    %v104 = vld [vmem:[#allocation2 + $0x90] sm:$0xff]
    %v105 = vld [vmem:[#allocation2 + $0x98] sm:$0xff]
    %v106 = vld [vmem:[#allocation2 + $0xa0] sm:$0xff]
    %v107 = vld [vmem:[#allocation2 + $0xa8] sm:$0xff]
    %v108 = vld [vmem:[#allocation2 + $0xb0] sm:$0xff]
    %v109 = vld [vmem:[#allocation2 + $0xb8] sm:$0xff]
    %v110 = vld [vmem:[#allocation2 + $0xc0] sm:$0xff]
    %v111 = vld [vmem:[#allocation2 + $0xc8] sm:$0xff]
    %v112 = vld [vmem:[#allocation2 + $0xd0] sm:$0xff]
    %v113 = vld [vmem:[#allocation2 + $0xd8] sm:$0xff]
    %v114 = vld [vmem:[#allocation2 + $0xe0] sm:$0xff]
    %v115 = vld [vmem:[#allocation2 + $0xe8] sm:$0xff]
    %v116 = vld [vmem:[#allocation2 + $0xf0] sm:$0xff]
    %v117 = vld [vmem:[#allocation2 + $0xf8] sm:$0xff]
    %v118 = vld [vmem:[#allocation3] sm:$0xff]
    %v119 = vld [vmem:[#allocation3 + $0x8] sm:$0xff]
    %v120 = vld [vmem:[#allocation3 + $0x10] sm:$0xff]
    %v121 = vld [vmem:[#allocation3 + $0x18] sm:$0xff]
    %v122 = vld [vmem:[#allocation3 + $0x20] sm:$0xff]
    %v123 = vld [vmem:[#allocation3 + $0x28] sm:$0xff]
    %v124 = vld [vmem:[#allocation3 + $0x30] sm:$0xff]
    %v125 = vld [vmem:[#allocation3 + $0x38] sm:$0xff]
    %v126 = vld [vmem:[#allocation3 + $0x40] sm:$0xff]
    %v127 = vld [vmem:[#allocation3 + $0x48] sm:$0xff]
    %v128 = vld [vmem:[#allocation3 + $0x50] sm:$0xff]
    %v129 = vld [vmem:[#allocation3 + $0x58] sm:$0xff]
    %v130 = vld [vmem:[#allocation3 + $0x60] sm:$0xff]
    %v131 = vld [vmem:[#allocation3 + $0x68] sm:$0xff]
    %v132 = vld [vmem:[#allocation3 + $0x70] sm:$0xff]
    %v133 = vld [vmem:[#allocation3 + $0x78] sm:$0xff]
    %v134 = vld [vmem:[#allocation3 + $0x80] sm:$0xff]
    %v135 = vld [vmem:[#allocation3 + $0x88] sm:$0xff]
    %v136 = vld [vmem:[#allocation3 + $0x90] sm:$0xff]
    %v137 = vld [vmem:[#allocation3 + $0x98] sm:$0xff]
    %v138 = vld [vmem:[#allocation3 + $0xa0] sm:$0xff]
    %v139 = vld [vmem:[#allocation3 + $0xa8] sm:$0xff]
    %v140 = vld [vmem:[#allocation3 + $0xb0] sm:$0xff]
    %v141 = vld [vmem:[#allocation3 + $0xb8] sm:$0xff]
    %v142 = vld [vmem:[#allocation3 + $0xc0] sm:$0xff]
    %v143 = vld [vmem:[#allocation3 + $0xc8] sm:$0xff]
    %v144 = vld [vmem:[#allocation3 + $0xd0] sm:$0xff]
    %v145 = vld [vmem:[#allocation3 + $0xd8] sm:$0xff]
    %v146 = vld [vmem:[#allocation3 + $0xe0] sm:$0xff]
    %v147 = vld [vmem:[#allocation3 + $0xe8] sm:$0xff]
    %v148 = vld [vmem:[#allocation3 + $0xf0] sm:$0xff]
    %v149 = vld [vmem:[#allocation3 + $0xf8] sm:$0xff]
    %v150 = vld [vmem:[#allocation6] sm:$0xf]
    %v151 = vld [vmem:[#allocation6 + $0x4] sm:$0xf]
    %v152 = vld [vmem:[#allocation6 + $0x8] sm:$0xf]
    %v153 = vld [vmem:[#allocation6 + $0xc] sm:$0xf]
    %v154 = vld [vmem:[#allocation6 + $0x10] sm:$0xf]
    %v155 = vld [vmem:[#allocation6 + $0x14] sm:$0xf]
    %v156 = vld [vmem:[#allocation6 + $0x18] sm:$0xf]
    %v157 = vld [vmem:[#allocation6 + $0x1c] sm:$0xf]
    %v158 = vld [vmem:[#allocation6 + $0x20] sm:$0xf]
    %v159 = vld [vmem:[#allocation6 + $0x24] sm:$0xf]
    %v160 = vld [vmem:[#allocation6 + $0x28] sm:$0xf]
    %v161 = vld [vmem:[#allocation6 + $0x2c] sm:$0xf]
    %v162 = vld [vmem:[#allocation6 + $0x30] sm:$0xf]
    %v163 = vld [vmem:[#allocation6 + $0x34] sm:$0xf]
    %v164 = vld [vmem:[#allocation6 + $0x38] sm:$0xf]
    %v165 = vld [vmem:[#allocation6 + $0x3c] sm:$0xf]
    %v166 = vld [vmem:[#allocation6 + $0x40] sm:$0xf]
    %v167 = vld [vmem:[#allocation6 + $0x44] sm:$0xf]
    %v168 = vld [vmem:[#allocation6 + $0x48] sm:$0xf]
    %v169 = vld [vmem:[#allocation6 + $0x4c] sm:$0xf]
    %v170 = vld [vmem:[#allocation6 + $0x50] sm:$0xf]
    %v171 = vld [vmem:[#allocation6 + $0x54] sm:$0xf]
    %v172 = vld [vmem:[#allocation6 + $0x58] sm:$0xf]
    %v173 = vld [vmem:[#allocation6 + $0x5c] sm:$0xf]
    %v174 = vld [vmem:[#allocation6 + $0x60] sm:$0xf]
    %v175 = vld [vmem:[#allocation6 + $0x64] sm:$0xf]
    %v176 = vld [vmem:[#allocation6 + $0x68] sm:$0xf]
    %v177 = vld [vmem:[#allocation6 + $0x6c] sm:$0xf]
    %v178 = vld [vmem:[#allocation6 + $0x70] sm:$0xf]
    %v179 = vld [vmem:[#allocation6 + $0x74] sm:$0xf]
    %v180 = vld [vmem:[#allocation6 + $0x78] sm:$0xf]
    %v181 = vld [vmem:[#allocation6 + $0x7c] sm:$0xf]
    %v214 = vunpack.c.l.b16 %v118
    %v215 = vunpack.c.h.b16 %v118
    %v216 = vunpack.c.l.b16 %v119
    %v217 = vunpack.c.h.b16 %v119
    %v218 = vunpack.c.l.b16 %v120
    %v219 = vunpack.c.h.b16 %v120
    %v220 = vunpack.c.l.b16 %v121
    %v221 = vunpack.c.h.b16 %v121
    %v222 = vunpack.c.l.b16 %v122
    %v223 = vunpack.c.h.b16 %v122
    %v224 = vunpack.c.l.b16 %v123
    %v225 = vunpack.c.h.b16 %v123
    %v226 = vunpack.c.l.b16 %v124
    %v227 = vunpack.c.h.b16 %v124
    %v228 = vunpack.c.l.b16 %v125
    %v229 = vunpack.c.h.b16 %v125
    %v230 = vunpack.c.l.b16 %v126
    %v231 = vunpack.c.h.b16 %v126
    %v232 = vunpack.c.l.b16 %v127
    %v233 = vunpack.c.h.b16 %v127
    %v234 = vunpack.c.l.b16 %v128
    %v235 = vunpack.c.h.b16 %v128
    %v236 = vunpack.c.l.b16 %v129
    %v237 = vunpack.c.h.b16 %v129
    %v238 = vunpack.c.l.b16 %v130
    %v239 = vunpack.c.h.b16 %v130
    %v240 = vunpack.c.l.b16 %v131
    %v241 = vunpack.c.h.b16 %v131
    %v242 = vunpack.c.l.b16 %v132
    %v243 = vunpack.c.h.b16 %v132
    %v244 = vunpack.c.l.b16 %v133
    %v245 = vunpack.c.h.b16 %v133
    %v246 = vunpack.c.l.b16 %v134
    %v247 = vunpack.c.h.b16 %v134
    %v248 = vunpack.c.l.b16 %v135
    %v249 = vunpack.c.h.b16 %v135
    %v250 = vunpack.c.l.b16 %v136
    %v251 = vunpack.c.h.b16 %v136
    %v252 = vunpack.c.l.b16 %v137
    %v253 = vunpack.c.h.b16 %v137
    %v254 = vunpack.c.l.b16 %v138
    %v255 = vunpack.c.h.b16 %v138
    %v256 = vunpack.c.l.b16 %v139
    %v257 = vunpack.c.h.b16 %v139
    %v258 = vunpack.c.l.b16 %v140
    %v259 = vunpack.c.h.b16 %v140
    %v260 = vunpack.c.l.b16 %v141
    %v261 = vunpack.c.h.b16 %v141
    %v262 = vunpack.c.l.b16 %v142
    %v263 = vunpack.c.h.b16 %v142
    %v264 = vunpack.c.l.b16 %v143
    %v265 = vunpack.c.h.b16 %v143
    %v266 = vunpack.c.l.b16 %v144
    %v267 = vunpack.c.h.b16 %v144
    %v268 = vunpack.c.l.b16 %v145
    %v269 = vunpack.c.h.b16 %v145
    %v270 = vunpack.c.l.b16 %v146
    %v271 = vunpack.c.h.b16 %v146
    %v272 = vunpack.c.l.b16 %v147
    %v273 = vunpack.c.h.b16 %v147
    %v274 = vunpack.c.l.b16 %v148
    %v275 = vunpack.c.h.b16 %v148
    %v276 = vunpack.c.l.b16 %v149
    %v277 = vunpack.c.h.b16 %v149
    %v278 = vpack.c.b16 %v216, %v214
    %v279 = vpack.c.b16 %v217, %v215
    %v280 = vpack.c.b16 %v220, %v218
    %v281 = vpack.c.b16 %v221, %v219
    %v282 = vpack.c.b16 %v224, %v222
    %v283 = vpack.c.b16 %v225, %v223
    %v284 = vpack.c.b16 %v228, %v226
    %v285 = vpack.c.b16 %v229, %v227
    %v286 = vpack.c.b16 %v232, %v230
    %v287 = vpack.c.b16 %v233, %v231
    %v288 = vpack.c.b16 %v236, %v234
    %v289 = vpack.c.b16 %v237, %v235
    %v290 = vpack.c.b16 %v240, %v238
    %v291 = vpack.c.b16 %v241, %v239
    %v292 = vpack.c.b16 %v244, %v242
    %v293 = vpack.c.b16 %v245, %v243
    %v294 = vpack.c.b16 %v248, %v246
    %v295 = vpack.c.b16 %v249, %v247
    %v296 = vpack.c.b16 %v252, %v250
    %v297 = vpack.c.b16 %v253, %v251
    %v298 = vpack.c.b16 %v256, %v254
    %v299 = vpack.c.b16 %v257, %v255
    %v300 = vpack.c.b16 %v260, %v258
    %v301 = vpack.c.b16 %v261, %v259
    %v302 = vpack.c.b16 %v264, %v262
    %v303 = vpack.c.b16 %v265, %v263
    %v304 = vpack.c.b16 %v268, %v266
    %v305 = vpack.c.b16 %v269, %v267
    %v306 = vpack.c.b16 %v272, %v270
    %v307 = vpack.c.b16 %v273, %v271
    %v308 = vpack.c.b16 %v276, %v274
    %v309 = vpack.c.b16 %v277, %v275
    %v374 = vunpack.c.l.b16 %v150
    %v375 = vunpack.c.l.b16 %v151
    %v376 = vunpack.c.l.b16 %v152
    %v377 = vunpack.c.l.b16 %v153
    %v378 = vunpack.c.l.b16 %v154
    %v379 = vunpack.c.l.b16 %v155
    %v380 = vunpack.c.l.b16 %v156
    %v381 = vunpack.c.l.b16 %v157
    %v382 = vunpack.c.l.b16 %v158
    %v383 = vunpack.c.l.b16 %v159
    %v384 = vunpack.c.l.b16 %v160
    %v385 = vunpack.c.l.b16 %v161
    %v386 = vunpack.c.l.b16 %v162
    %v387 = vunpack.c.l.b16 %v163
    %v388 = vunpack.c.l.b16 %v164
    %v389 = vunpack.c.l.b16 %v165
    %v390 = vunpack.c.l.b16 %v166
    %v391 = vunpack.c.l.b16 %v167
    %v392 = vunpack.c.l.b16 %v168
    %v393 = vunpack.c.l.b16 %v169
    %v394 = vunpack.c.l.b16 %v170
    %v395 = vunpack.c.l.b16 %v171
    %v396 = vunpack.c.l.b16 %v172
    %v397 = vunpack.c.l.b16 %v173
    %v398 = vunpack.c.l.b16 %v174
    %v399 = vunpack.c.l.b16 %v175
    %v400 = vunpack.c.l.b16 %v176
    %v401 = vunpack.c.l.b16 %v177
    %v402 = vunpack.c.l.b16 %v178
    %v403 = vunpack.c.l.b16 %v179
    %v404 = vunpack.c.l.b16 %v180
    %v405 = vunpack.c.l.b16 %v181
    %v406 = vpack.c.b16 %v375, %v374
    %v407 = vpack.c.b16 %v377, %v376
    %v408 = vpack.c.b16 %v379, %v378
    %v409 = vpack.c.b16 %v381, %v380
    %v410 = vpack.c.b16 %v383, %v382
    %v411 = vpack.c.b16 %v385, %v384
    %v412 = vpack.c.b16 %v387, %v386
    %v413 = vpack.c.b16 %v389, %v388
    %v414 = vpack.c.b16 %v391, %v390
    %v415 = vpack.c.b16 %v393, %v392
    %v416 = vpack.c.b16 %v395, %v394
    %v417 = vpack.c.b16 %v397, %v396
    %v418 = vpack.c.b16 %v399, %v398
    %v419 = vpack.c.b16 %v401, %v400
    %v420 = vpack.c.b16 %v403, %v402
    %v421 = vpack.c.b16 %v405, %v404
    %438 = vmatpush.bf16.msra.mxu0 %v413
    %439 = vmatpush.bf16.msra.mxu0 %v412
    %440 = vmatpush.bf16.msra.mxu0 %v411
    %441 = vmatpush.bf16.msra.mxu0 %v410
    %442 = vmatpush.bf16.msra.mxu0 %v409
    %443 = vmatpush.bf16.msra.mxu0 %v408
    %444 = vmatpush.bf16.msra.mxu0 %v407
    %445 = vmatpush.bf16.msra.mxu0 %v406
    %446 = vmatmul.bf16.gmra.mxu0 %v278
    %v447 = vpop.f32.mrf.mxu0
    %v448 = vadd.f32 0.0, %v447
    %v449 = vpop.f32.mrf.mxu0
    %v450 = vadd.f32 0.0, %v449
    %451 = vmatmul.bf16.gmra.mxu0 %v280
    %v452 = vpop.f32.mrf.mxu0
    %v453 = vadd.f32 0.0, %v452
    %v454 = vpop.f32.mrf.mxu0
    %v455 = vadd.f32 0.0, %v454
    %456 = vmatmul.bf16.gmra.mxu0 %v282
    %v457 = vpop.f32.mrf.mxu0
    %v458 = vadd.f32 0.0, %v457
    %v459 = vpop.f32.mrf.mxu0
    %v460 = vadd.f32 0.0, %v459
    %461 = vmatmul.bf16.gmra.mxu0 %v284
    %v462 = vpop.f32.mrf.mxu0
    %v463 = vadd.f32 0.0, %v462
    %v464 = vpop.f32.mrf.mxu0
    %v465 = vadd.f32 0.0, %v464
    %466 = vmatmul.bf16.gmra.mxu0 %v286
    %v467 = vpop.f32.mrf.mxu0
    %v468 = vadd.f32 0.0, %v467
    %v469 = vpop.f32.mrf.mxu0
    %v470 = vadd.f32 0.0, %v469
    %471 = vmatmul.bf16.gmra.mxu0 %v288
    %v472 = vpop.f32.mrf.mxu0
    %v473 = vadd.f32 0.0, %v472
    %v474 = vpop.f32.mrf.mxu0
    %v475 = vadd.f32 0.0, %v474
    %476 = vmatmul.bf16.gmra.mxu0 %v290
    %v477 = vpop.f32.mrf.mxu0
    %v478 = vadd.f32 0.0, %v477
    %v479 = vpop.f32.mrf.mxu0
    %v480 = vadd.f32 0.0, %v479
    %481 = vmatmul.bf16.gmra.mxu0 %v292
    %v482 = vpop.f32.mrf.mxu0
    %v483 = vadd.f32 0.0, %v482
    %v484 = vpop.f32.mrf.mxu0
    %v485 = vadd.f32 0.0, %v484
    %486 = vmatmul.bf16.gmra.mxu0 %v294
    %v487 = vpop.f32.mrf.mxu0
    %v488 = vadd.f32 0.0, %v487
    %v489 = vpop.f32.mrf.mxu0
    %v490 = vadd.f32 0.0, %v489
    %491 = vmatmul.bf16.gmra.mxu0 %v296
    %v492 = vpop.f32.mrf.mxu0
    %v493 = vadd.f32 0.0, %v492
    %v494 = vpop.f32.mrf.mxu0
    %v495 = vadd.f32 0.0, %v494
    %496 = vmatmul.bf16.gmra.mxu0 %v298
    %v497 = vpop.f32.mrf.mxu0
    %v498 = vadd.f32 0.0, %v497
    %v499 = vpop.f32.mrf.mxu0
    %v500 = vadd.f32 0.0, %v499
    %501 = vmatmul.bf16.gmra.mxu0 %v300
    %v502 = vpop.f32.mrf.mxu0
    %v503 = vadd.f32 0.0, %v502
    %v504 = vpop.f32.mrf.mxu0
    %v505 = vadd.f32 0.0, %v504
    %506 = vmatmul.bf16.gmra.mxu0 %v302
    %v507 = vpop.f32.mrf.mxu0
    %v508 = vadd.f32 0.0, %v507
    %v509 = vpop.f32.mrf.mxu0
    %v510 = vadd.f32 0.0, %v509
    %511 = vmatmul.bf16.gmra.mxu0 %v304
    %v512 = vpop.f32.mrf.mxu0
    %v513 = vadd.f32 0.0, %v512
    %v514 = vpop.f32.mrf.mxu0
    %v515 = vadd.f32 0.0, %v514
    %516 = vmatmul.bf16.gmra.mxu0 %v306
    %v517 = vpop.f32.mrf.mxu0
    %v518 = vadd.f32 0.0, %v517
    %v519 = vpop.f32.mrf.mxu0
    %v520 = vadd.f32 0.0, %v519
    %521 = vmatmul.bf16.gmra.mxu0 %v308
    %v522 = vpop.f32.mrf.mxu0
    %v523 = vadd.f32 0.0, %v522
    %v524 = vpop.f32.mrf.mxu0
    %v525 = vadd.f32 0.0, %v524
    %526 = vdwg.mxu0
    %527 = vmatpush.bf16.msra.mxu0 %v421
    %528 = vmatpush.bf16.msra.mxu0 %v420
    %529 = vmatpush.bf16.msra.mxu0 %v419
    %530 = vmatpush.bf16.msra.mxu0 %v418
    %531 = vmatpush.bf16.msra.mxu0 %v417
    %532 = vmatpush.bf16.msra.mxu0 %v416
    %533 = vmatpush.bf16.msra.mxu0 %v415
    %534 = vmatpush.bf16.msra.mxu0 %v414
    %535 = vmatmul.bf16.gmra.mxu0 %v279
    %v536 = vpop.f32.mrf.mxu0
    %v537 = vadd.f32 %v448, %v536
    %v538 = vpop.f32.mrf.mxu0
    %v539 = vadd.f32 %v450, %v538
    %540 = vmatmul.bf16.gmra.mxu0 %v281
    %v541 = vpop.f32.mrf.mxu0
    %v542 = vadd.f32 %v453, %v541
    %v543 = vpop.f32.mrf.mxu0
    %v544 = vadd.f32 %v455, %v543
    %545 = vmatmul.bf16.gmra.mxu0 %v283
    %v546 = vpop.f32.mrf.mxu0
    %v547 = vadd.f32 %v458, %v546
    %v548 = vpop.f32.mrf.mxu0
    %v549 = vadd.f32 %v460, %v548
    %550 = vmatmul.bf16.gmra.mxu0 %v285
    %v551 = vpop.f32.mrf.mxu0
    %v552 = vadd.f32 %v463, %v551
    %v553 = vpop.f32.mrf.mxu0
    %v554 = vadd.f32 %v465, %v553
    %555 = vmatmul.bf16.gmra.mxu0 %v287
    %v556 = vpop.f32.mrf.mxu0
    %v557 = vadd.f32 %v468, %v556
    %v558 = vpop.f32.mrf.mxu0
    %v559 = vadd.f32 %v470, %v558
    %560 = vmatmul.bf16.gmra.mxu0 %v289
    %v561 = vpop.f32.mrf.mxu0
    %v562 = vadd.f32 %v473, %v561
    %v563 = vpop.f32.mrf.mxu0
    %v564 = vadd.f32 %v475, %v563
    %565 = vmatmul.bf16.gmra.mxu0 %v291
    %v566 = vpop.f32.mrf.mxu0
    %v567 = vadd.f32 %v478, %v566
    %v568 = vpop.f32.mrf.mxu0
    %v569 = vadd.f32 %v480, %v568
    %570 = vmatmul.bf16.gmra.mxu0 %v293
    %v571 = vpop.f32.mrf.mxu0
    %v572 = vadd.f32 %v483, %v571
    %v573 = vpop.f32.mrf.mxu0
    %v574 = vadd.f32 %v485, %v573
    %575 = vmatmul.bf16.gmra.mxu0 %v295
    %v576 = vpop.f32.mrf.mxu0
    %v577 = vadd.f32 %v488, %v576
    %v578 = vpop.f32.mrf.mxu0
    %v579 = vadd.f32 %v490, %v578
    %580 = vmatmul.bf16.gmra.mxu0 %v297
    %v581 = vpop.f32.mrf.mxu0
    %v582 = vadd.f32 %v493, %v581
    %v583 = vpop.f32.mrf.mxu0
    %v584 = vadd.f32 %v495, %v583
    %585 = vmatmul.bf16.gmra.mxu0 %v299
    %v586 = vpop.f32.mrf.mxu0
    %v587 = vadd.f32 %v498, %v586
    %v588 = vpop.f32.mrf.mxu0
    %v589 = vadd.f32 %v500, %v588
    %590 = vmatmul.bf16.gmra.mxu0 %v301
    %v591 = vpop.f32.mrf.mxu0
    %v592 = vadd.f32 %v503, %v591
    %v593 = vpop.f32.mrf.mxu0
    %v594 = vadd.f32 %v505, %v593
    %595 = vmatmul.bf16.gmra.mxu0 %v303
    %v596 = vpop.f32.mrf.mxu0
    %v597 = vadd.f32 %v508, %v596
    %v598 = vpop.f32.mrf.mxu0
    %v599 = vadd.f32 %v510, %v598
    %600 = vmatmul.bf16.gmra.mxu0 %v305
    %v601 = vpop.f32.mrf.mxu0
    %v602 = vadd.f32 %v513, %v601
    %v603 = vpop.f32.mrf.mxu0
    %v604 = vadd.f32 %v515, %v603
    %605 = vmatmul.bf16.gmra.mxu0 %v307
    %v606 = vpop.f32.mrf.mxu0
    %v607 = vadd.f32 %v518, %v606
    %v608 = vpop.f32.mrf.mxu0
    %v609 = vadd.f32 %v520, %v608
    %610 = vmatmul.bf16.gmra.mxu0 %v309
    %v611 = vpop.f32.mrf.mxu0
    %v612 = vadd.f32 %v523, %v611
    %v613 = vpop.f32.mrf.mxu0
    %v614 = vadd.f32 %v525, %v613
    %615 = vdwg.mxu0
    %v616 = vadd.f32 %v86, %v537
    %v617 = vadd.f32 %v87, %v539
    %v618 = vadd.f32 %v88, %v542
    %v619 = vadd.f32 %v89, %v544
    %v620 = vadd.f32 %v90, %v547
    %v621 = vadd.f32 %v91, %v549
    %v622 = vadd.f32 %v92, %v552
    %v623 = vadd.f32 %v93, %v554
    %v624 = vadd.f32 %v94, %v557
    %v625 = vadd.f32 %v95, %v559
    %v626 = vadd.f32 %v96, %v562
    %v627 = vadd.f32 %v97, %v564
    %v628 = vadd.f32 %v98, %v567
    %v629 = vadd.f32 %v99, %v569
    %v630 = vadd.f32 %v100, %v572
    %v631 = vadd.f32 %v101, %v574
    %v632 = vadd.f32 %v102, %v577
    %v633 = vadd.f32 %v103, %v579
    %v634 = vadd.f32 %v104, %v582
    %v635 = vadd.f32 %v105, %v584
    %v636 = vadd.f32 %v106, %v587
    %v637 = vadd.f32 %v107, %v589
    %v638 = vadd.f32 %v108, %v592
    %v639 = vadd.f32 %v109, %v594
    %v640 = vadd.f32 %v110, %v597
    %v641 = vadd.f32 %v111, %v599
    %v642 = vadd.f32 %v112, %v602
    %v643 = vadd.f32 %v113, %v604
    %v644 = vadd.f32 %v114, %v607
    %v645 = vadd.f32 %v115, %v609
    %v646 = vadd.f32 %v116, %v612
    %v647 = vadd.f32 %v117, %v614
    %648 = vst [vmem:[#allocation2] sm:$0xff] %v616
    %649 = vst [vmem:[#allocation2 + $0x8] sm:$0xff] %v617
    %650 = vst [vmem:[#allocation2 + $0x10] sm:$0xff] %v618
    %651 = vst [vmem:[#allocation2 + $0x18] sm:$0xff] %v619
    %652 = vst [vmem:[#allocation2 + $0x20] sm:$0xff] %v620
    %653 = vst [vmem:[#allocation2 + $0x28] sm:$0xff] %v621
    %654 = vst [vmem:[#allocation2 + $0x30] sm:$0xff] %v622
    %655 = vst [vmem:[#allocation2 + $0x38] sm:$0xff] %v623
    %656 = vst [vmem:[#allocation2 + $0x40] sm:$0xff] %v624
    %657 = vst [vmem:[#allocation2 + $0x48] sm:$0xff] %v625
    %658 = vst [vmem:[#allocation2 + $0x50] sm:$0xff] %v626
    %659 = vst [vmem:[#allocation2 + $0x58] sm:$0xff] %v627
    %660 = vst [vmem:[#allocation2 + $0x60] sm:$0xff] %v628
    %661 = vst [vmem:[#allocation2 + $0x68] sm:$0xff] %v629
    %662 = vst [vmem:[#allocation2 + $0x70] sm:$0xff] %v630
    %663 = vst [vmem:[#allocation2 + $0x78] sm:$0xff] %v631
    %664 = vst [vmem:[#allocation2 + $0x80] sm:$0xff] %v632
    %665 = vst [vmem:[#allocation2 + $0x88] sm:$0xff] %v633
    %666 = vst [vmem:[#allocation2 + $0x90] sm:$0xff] %v634
    %667 = vst [vmem:[#allocation2 + $0x98] sm:$0xff] %v635
    %668 = vst [vmem:[#allocation2 + $0xa0] sm:$0xff] %v636
    %669 = vst [vmem:[#allocation2 + $0xa8] sm:$0xff] %v637
    %670 = vst [vmem:[#allocation2 + $0xb0] sm:$0xff] %v638
    %671 = vst [vmem:[#allocation2 + $0xb8] sm:$0xff] %v639
    %672 = vst [vmem:[#allocation2 + $0xc0] sm:$0xff] %v640
    %673 = vst [vmem:[#allocation2 + $0xc8] sm:$0xff] %v641
    %674 = vst [vmem:[#allocation2 + $0xd0] sm:$0xff] %v642
    %675 = vst [vmem:[#allocation2 + $0xd8] sm:$0xff] %v643
    %676 = vst [vmem:[#allocation2 + $0xe0] sm:$0xff] %v644
    %677 = vst [vmem:[#allocation2 + $0xe8] sm:$0xff] %v645
    %678 = vst [vmem:[#allocation2 + $0xf0] sm:$0xff] %v646
    %679 = vst [vmem:[#allocation2 + $0xf8] sm:$0xff] %v647
    // Predicated region
    $region30: #{tpu_custom_call.1} parent=1 // pred_check
      %p680 = pneg %p50
    $region31: #{tpu_custom_call.1} parent=1 // pred_check_branch
      %682 = sbr.rel (%p680) target = $region33
    $region32: #{tpu_custom_call.1} parent=1 // pred_region
      %v683 = vld [vmem:[#allocation2] sm:$0xff]
      %v684 = vld [vmem:[#allocation2 + $0x8] sm:$0xff]
      %v685 = vld [vmem:[#allocation2 + $0x10] sm:$0xff]
      %v686 = vld [vmem:[#allocation2 + $0x18] sm:$0xff]
      %v687 = vld [vmem:[#allocation2 + $0x20] sm:$0xff]
      %v688 = vld [vmem:[#allocation2 + $0x28] sm:$0xff]
      %v689 = vld [vmem:[#allocation2 + $0x30] sm:$0xff]
      %v690 = vld [vmem:[#allocation2 + $0x38] sm:$0xff]
      %v691 = vld [vmem:[#allocation2 + $0x40] sm:$0xff]
      %v692 = vld [vmem:[#allocation2 + $0x48] sm:$0xff]
      %v693 = vld [vmem:[#allocation2 + $0x50] sm:$0xff]
      %v694 = vld [vmem:[#allocation2 + $0x58] sm:$0xff]
      %v695 = vld [vmem:[#allocation2 + $0x60] sm:$0xff]
      %v696 = vld [vmem:[#allocation2 + $0x68] sm:$0xff]
      %v697 = vld [vmem:[#allocation2 + $0x70] sm:$0xff]
      %v698 = vld [vmem:[#allocation2 + $0x78] sm:$0xff]
      %v699 = vld [vmem:[#allocation2 + $0x80] sm:$0xff]
      %v700 = vld [vmem:[#allocation2 + $0x88] sm:$0xff]
      %v701 = vld [vmem:[#allocation2 + $0x90] sm:$0xff]
      %v702 = vld [vmem:[#allocation2 + $0x98] sm:$0xff]
      %v703 = vld [vmem:[#allocation2 + $0xa0] sm:$0xff]
      %v704 = vld [vmem:[#allocation2 + $0xa8] sm:$0xff]
      %v705 = vld [vmem:[#allocation2 + $0xb0] sm:$0xff]
      %v706 = vld [vmem:[#allocation2 + $0xb8] sm:$0xff]
      %v707 = vld [vmem:[#allocation2 + $0xc0] sm:$0xff]
      %v708 = vld [vmem:[#allocation2 + $0xc8] sm:$0xff]
      %v709 = vld [vmem:[#allocation2 + $0xd0] sm:$0xff]
      %v710 = vld [vmem:[#allocation2 + $0xd8] sm:$0xff]
      %v711 = vld [vmem:[#allocation2 + $0xe0] sm:$0xff]
      %v712 = vld [vmem:[#allocation2 + $0xe8] sm:$0xff]
      %v713 = vld [vmem:[#allocation2 + $0xf0] sm:$0xff]
      %v714 = vld [vmem:[#allocation2 + $0xf8] sm:$0xff]
      %v715 = vld [vmem:[%s2] sm:$0x1]
      %v717 = vperm.slane %v715, 0
      %v719 = vmul.f32 %v683, %v717
      %v720 = vmul.f32 %v684, %v717
      %v721 = vmul.f32 %v685, %v717
      %v722 = vmul.f32 %v686, %v717
      %v723 = vmul.f32 %v687, %v717
      %v724 = vmul.f32 %v688, %v717
      %v725 = vmul.f32 %v689, %v717
      %v726 = vmul.f32 %v690, %v717
      %v727 = vmul.f32 %v691, %v717
      %v728 = vmul.f32 %v692, %v717
      %v729 = vmul.f32 %v693, %v717
      %v730 = vmul.f32 %v694, %v717
      %v731 = vmul.f32 %v695, %v717
      %v732 = vmul.f32 %v696, %v717
      %v733 = vmul.f32 %v697, %v717
      %v734 = vmul.f32 %v698, %v717
      %v735 = vmul.f32 %v699, %v717
      %v736 = vmul.f32 %v700, %v717
      %v737 = vmul.f32 %v701, %v717
      %v738 = vmul.f32 %v702, %v717
      %v739 = vmul.f32 %v703, %v717
      %v740 = vmul.f32 %v704, %v717
      %v741 = vmul.f32 %v705, %v717
      %v742 = vmul.f32 %v706, %v717
      %v743 = vmul.f32 %v707, %v717
      %v744 = vmul.f32 %v708, %v717
      %v745 = vmul.f32 %v709, %v717
      %v746 = vmul.f32 %v710, %v717
      %v747 = vmul.f32 %v711, %v717
      %v748 = vmul.f32 %v712, %v717
      %v749 = vmul.f32 %v713, %v717
      %v750 = vmul.f32 %v714, %v717
      %v751 = vld [vmem:[%s3] sm:$0x1]
      %v753 = vperm.slane %v751, 0
      %v755 = vadd.f32 %v719, %v753
      %v756 = vadd.f32 %v720, %v753
      %v757 = vadd.f32 %v721, %v753
      %v758 = vadd.f32 %v722, %v753
      %v759 = vadd.f32 %v723, %v753
      %v760 = vadd.f32 %v724, %v753
      %v761 = vadd.f32 %v725, %v753
      %v762 = vadd.f32 %v726, %v753
      %v763 = vadd.f32 %v727, %v753
      %v764 = vadd.f32 %v728, %v753
      %v765 = vadd.f32 %v729, %v753
      %v766 = vadd.f32 %v730, %v753
      %v767 = vadd.f32 %v731, %v753
      %v768 = vadd.f32 %v732, %v753
      %v769 = vadd.f32 %v733, %v753
      %v770 = vadd.f32 %v734, %v753
      %v771 = vadd.f32 %v735, %v753
      %v772 = vadd.f32 %v736, %v753
      %v773 = vadd.f32 %v737, %v753
      %v774 = vadd.f32 %v738, %v753
      %v775 = vadd.f32 %v739, %v753
      %v776 = vadd.f32 %v740, %v753
      %v777 = vadd.f32 %v741, %v753
      %v778 = vadd.f32 %v742, %v753
      %v779 = vadd.f32 %v743, %v753
      %v780 = vadd.f32 %v744, %v753
      %v781 = vadd.f32 %v745, %v753
      %v782 = vadd.f32 %v746, %v753
      %v783 = vadd.f32 %v747, %v753
      %v784 = vadd.f32 %v748, %v753
      %v785 = vadd.f32 %v749, %v753
      %v786 = vadd.f32 %v750, %v753
      %v787 = vmax.f32 %v755, 0.0
      %v788 = vmax.f32 %v756, 0.0
      %v789 = vmax.f32 %v757, 0.0
      %v790 = vmax.f32 %v758, 0.0
      %v791 = vmax.f32 %v759, 0.0
      %v792 = vmax.f32 %v760, 0.0
      %v793 = vmax.f32 %v761, 0.0
      %v794 = vmax.f32 %v762, 0.0
      %v795 = vmax.f32 %v763, 0.0
      %v796 = vmax.f32 %v764, 0.0
      %v797 = vmax.f32 %v765, 0.0
      %v798 = vmax.f32 %v766, 0.0
      %v799 = vmax.f32 %v767, 0.0
      %v800 = vmax.f32 %v768, 0.0
      %v801 = vmax.f32 %v769, 0.0
      %v802 = vmax.f32 %v770, 0.0
      %v803 = vmax.f32 %v771, 0.0
      %v804 = vmax.f32 %v772, 0.0
      %v805 = vmax.f32 %v773, 0.0
      %v806 = vmax.f32 %v774, 0.0
      %v807 = vmax.f32 %v775, 0.0
      %v808 = vmax.f32 %v776, 0.0
      %v809 = vmax.f32 %v777, 0.0
      %v810 = vmax.f32 %v778, 0.0
      %v811 = vmax.f32 %v779, 0.0
      %v812 = vmax.f32 %v780, 0.0
      %v813 = vmax.f32 %v781, 0.0
      %v814 = vmax.f32 %v782, 0.0
      %v815 = vmax.f32 %v783, 0.0
      %v816 = vmax.f32 %v784, 0.0
      %v817 = vmax.f32 %v785, 0.0
      %v818 = vmax.f32 %v786, 0.0
      %819 = vst [vmem:[#allocation8] sm:$0xff] %v787
      %820 = vst [vmem:[#allocation8 + $0x8] sm:$0xff] %v788
      %821 = vst [vmem:[#allocation8 + $0x10] sm:$0xff] %v789
      %822 = vst [vmem:[#allocation8 + $0x18] sm:$0xff] %v790
      %823 = vst [vmem:[#allocation8 + $0x20] sm:$0xff] %v791
      %824 = vst [vmem:[#allocation8 + $0x28] sm:$0xff] %v792
      %825 = vst [vmem:[#allocation8 + $0x30] sm:$0xff] %v793
      %826 = vst [vmem:[#allocation8 + $0x38] sm:$0xff] %v794
      %827 = vst [vmem:[#allocation8 + $0x40] sm:$0xff] %v795
      %828 = vst [vmem:[#allocation8 + $0x48] sm:$0xff] %v796
      %829 = vst [vmem:[#allocation8 + $0x50] sm:$0xff] %v797
      %830 = vst [vmem:[#allocation8 + $0x58] sm:$0xff] %v798
      %831 = vst [vmem:[#allocation8 + $0x60] sm:$0xff] %v799
      %832 = vst [vmem:[#allocation8 + $0x68] sm:$0xff] %v800
      %833 = vst [vmem:[#allocation8 + $0x70] sm:$0xff] %v801
      %834 = vst [vmem:[#allocation8 + $0x78] sm:$0xff] %v802
      %835 = vst [vmem:[#allocation8 + $0x80] sm:$0xff] %v803
      %836 = vst [vmem:[#allocation8 + $0x88] sm:$0xff] %v804
      %837 = vst [vmem:[#allocation8 + $0x90] sm:$0xff] %v805
      %838 = vst [vmem:[#allocation8 + $0x98] sm:$0xff] %v806
      %839 = vst [vmem:[#allocation8 + $0xa0] sm:$0xff] %v807
      %840 = vst [vmem:[#allocation8 + $0xa8] sm:$0xff] %v808
      %841 = vst [vmem:[#allocation8 + $0xb0] sm:$0xff] %v809
      %842 = vst [vmem:[#allocation8 + $0xb8] sm:$0xff] %v810
      %843 = vst [vmem:[#allocation8 + $0xc0] sm:$0xff] %v811
      %844 = vst [vmem:[#allocation8 + $0xc8] sm:$0xff] %v812
      %845 = vst [vmem:[#allocation8 + $0xd0] sm:$0xff] %v813
      %846 = vst [vmem:[#allocation8 + $0xd8] sm:$0xff] %v814
      %847 = vst [vmem:[#allocation8 + $0xe0] sm:$0xff] %v815
      %848 = vst [vmem:[#allocation8 + $0xe8] sm:$0xff] %v816
      %849 = vst [vmem:[#allocation8 + $0xf0] sm:$0xff] %v817
      %850 = vst [vmem:[#allocation8 + $0xf8] sm:$0xff] %v818
    $region33: #{tpu_custom_call.1} parent=1 // pred_fallthru
      _
    // Predicated region
    $region34: #{tpu_custom_call.1} parent=1 // pred_check
      _
    $region35: #{tpu_custom_call.1} parent=1 // pred_check_branch
      %852 = sbr.rel (0) target = $region37
    $region36: #{tpu_custom_call.1} parent=1 // pred_region
      %854 = vsyncadd [#allocation5], 0
      %s855 = sshll.u32 [#allocation8], 4
      %s856 = int_to_ptr.vmem [resolvable:$true] %s855
      %s857 = sshll.u32 %s4, 4
      %s858 = int_to_ptr.hbm [resolvable:$true] %s857
      %863 = dma.vmem_to_hbm [thread:$0]  %s856, 4096, %s858, [#allocation5], 128, 128, 8
    $region37: #{tpu_custom_call.1} parent=1 // pred_fallthru
      _
    // Predicated region
    $region38: #{tpu_custom_call.1} parent=1 // pred_check
      _
    $region39: #{tpu_custom_call.1} parent=1 // pred_check_branch
      %865 = sbr.rel (0) target = $region41
    $region40: #{tpu_custom_call.1} parent=1 // pred_region
      %867 = dma.done [#allocation5], 4096
    $region41: #{tpu_custom_call.1} parent=1 // pred_fallthru
      _
    %868 = vsyncpa [#allocation4], 1
    %869 = vsyncpa [#allocation7], 1
    %870 = vsyncpa [#allocation5], 1

</llo_original>
